<compile_context>
chip_gen: v7x
topology: tpu7x:2x2x1
jax: 0.10.0
libtpu: 0.0.40
codegen_flags: <defaults>
</compile_context>

<pallas_src>
import jax
import jax.numpy as jnp
from jax.experimental import pallas as pl
from jax.experimental.pallas import tpu as pltpu


_MAX_FRAMES_PER_BLOCK = 8   # static unroll cap over (b, t) frames per grid step
_MIN_GRID_STEPS = 8         # >= ~4 pipelined steps per TensorCore (v7x megacore)
_LANE = 128                 # spatial tile must be a 128-multiple or the full extent


def _vmem_capacity_bytes():
    """Physical VMEM of the current chip; conservative (v7x, 64 MiB) fallback."""
    try:
        cap = getattr(pltpu.get_tpu_info(), "vmem_capacity_bytes", None)
        if cap:
            return int(cap)
    except Exception:
        pass
    return 64 * 1024 * 1024


def _pick_tiles(bt, hw, *, c_in, c_out, max_c, x_bytes, out_bytes, wb_bytes,
                budget):
    """Pick (frames_per_block, spatial_tile, est_vmem_bytes).

    Budgets the full per-step VMEM footprint: double-buffered input and output
    blocks, the bf16 cast + widest f32 intermediate of every (statically
    unrolled) frame, the hoisted bias broadcast, and the resident weights.
    """
    per_frame_lane = (2 * c_in * x_bytes        # input block, 2x buffers
                      + 2 * c_out * out_bytes   # output block, 2x buffers
                      + c_in * 2                # bf16 cast of the frame
                      + max_c * 4)              # widest f32 intermediate

    def vmem_bytes(nbt, t):
        return (nbt * per_frame_lane + max_c * 4) * t + 2 * wb_bytes

    def cdiv(a, b):
        return -(-a // b)

    # Spatial (lane) tile: full extent when it fits, else largest 128-multiple.
    if hw <= _LANE or vmem_bytes(1, hw) <= budget:
        tile_hw = hw
    else:
        per_lane = vmem_bytes(1, 1) - 2 * wb_bytes
        t_cap = max(_LANE, (budget - 2 * wb_bytes) // max(1, per_lane))
        tile_hw = min(hw, max(_LANE, (t_cap // _LANE) * _LANE))

    # Frames per block: as many as fit the budget, up to the unroll cap.
    nbt = 1
    for cand in range(min(_MAX_FRAMES_PER_BLOCK, bt), 0, -1):
        if vmem_bytes(cand, tile_hw) <= budget:
            nbt = cand
            break

    # Keep enough total grid steps for pipelining / v7x megacore balance.
    while cdiv(bt, nbt) * cdiv(hw, tile_hw) < _MIN_GRID_STEPS:
        if nbt > 1:
            nbt //= 2
        else:
            new_t = (tile_hw // 2 // _LANE) * _LANE
            if new_t >= _LANE and new_t < tile_hw:
                tile_hw = new_t
            else:
                break

    return nbt, tile_hw, vmem_bytes(nbt, tile_hw)


def _make_fused_kernel(schedule, nbt, compute_dtype):
    """Build the fused MidMetaNet kernel body for a static layer schedule.

    Kernel args: (x_ref, w0, b0, w1, b1, ..., o_ref).  Only layers with a
    channel `reduction` contribute a (w, b) pair, in schedule order.
    """

    def kernel(x_ref, *refs):
        o_ref = refs[-1]
        wb = refs[:-1]
        tile = x_ref.shape[-1]

        # Hoist the (tiny, VMEM-resident) weight loads and the bias broadcast
        # out of the per-frame unrolled loop (broadcast_in_dim is not CSE'd).
        params = []
        for i in range(len(wb) // 2):
            w = wb[2 * i][...]                         # (Cout, Cin) bf16
            b = wb[2 * i + 1][...]                     # (Cout, 1)   f32
            params.append((w, jnp.broadcast_to(b, (b.shape[0], tile))))

        for j in range(nbt):                           # static unroll over frames
            if params:
                # Cast in VMEM: input stays in its native dtype in HBM.
                z = x_ref[j].astype(compute_dtype)     # (C_in, tile)
            else:
                z = x_ref[j]
            idx = 0
            for has_reduction in schedule:
                # TODO(synk): inner COTERE block (self.block) source not
                # provided; it maps in_channels -> in_channels and is treated
                # as identity here.
                if has_reduction:
                    w, b_bc = params[idx]
                    idx += 1
                    acc = jnp.dot(w, z, preferred_element_type=jnp.float32)
                    z = acc + b_bc                     # f32 accumulator + bias
                    if idx < len(params):              # next matmul wants bf16
                        z = z.astype(compute_dtype)
            o_ref[j] = z.astype(o_ref.dtype)           # lane-dense store

    return kernel


def mid_meta_net_forward(x, layers, *, compute_dtype=jnp.bfloat16,
                         out_dtype=None, precompose=True):
    """
    x: (B, T, C, H, W)
    layers: list of (in_c, out_c, (w, b) or None), length N2;
            w: (out_c, in_c)  [PyTorch Conv3d weight layout, k=1 squeezed],
            b: (out_c, 1)
    returns: (B, T, C_out_final, H, W) in out_dtype (default: x.dtype)
    """
    B, T, C, H, W = x.shape
    out_dtype = x.dtype if out_dtype is None else out_dtype
    BT, HW = B * T, H * W

    # Channel-first flattened view: free reshape, input stays in native dtype
    # (the bf16 cast happens inside the kernel -> one HBM pass on the input).
    x3 = x.reshape(BT, C, HW)

    if precompose:
        # TODO(synk): valid only while the inner COTERE block is an identity
        # placeholder -- the whole affine chain collapses to one matmul+bias.
        w_comb = jnp.eye(C, dtype=jnp.float32)
        b_comb = jnp.zeros((C, 1), jnp.float32)
        for (_, _, red) in layers:
            if red is not None:
                w, b = red
                w32 = w.astype(jnp.float32)
                b_comb = w32 @ b_comb + b.reshape(-1, 1).astype(jnp.float32)
                w_comb = w32 @ w_comb
        c_final = w_comb.shape[0]
        schedule = (True,)
        wb_flat = [w_comb.astype(compute_dtype), b_comb]
        max_c = max(C, c_final)
    else:
        schedule = tuple(red is not None for (_, _, red) in layers)
        wb_flat = []
        c_final = C
        max_c = C
        for (_, _, red) in layers:
            if red is not None:
                w, b = red
                wb_flat.append(w.astype(compute_dtype))
                wb_flat.append(b.reshape(-1, 1).astype(jnp.float32))
                c_final = w.shape[0]
                max_c = max(max_c, c_final)

    x_bytes = jnp.dtype(x.dtype).itemsize
    out_bytes = jnp.dtype(out_dtype).itemsize
    wb_bytes = sum(int(a.size) * jnp.dtype(a.dtype).itemsize for a in wb_flat)

    vmem_cap = _vmem_capacity_bytes()
    budget = int(0.4 * vmem_cap)          # ~25 MiB on v7x, ~51 MiB on v5e/v6e

    nbt, tile_hw, est_bytes = _pick_tiles(
        BT, HW, c_in=C, c_out=c_final, max_c=max_c,
        x_bytes=x_bytes, out_bytes=out_bytes, wb_bytes=wb_bytes, budget=budget)

    n_f = pl.cdiv(BT, nbt)
    n_s = pl.cdiv(HW, tile_hw)

    # Put the axis with more steps first so the leading parallel axis splits
    # evenly across v7x's two TensorCores (neutral on v5e/v6e).
    if n_s > n_f:
        grid = (n_s, n_f)
        xo_map = lambda s, n: (n, 0, s)
    else:
        grid = (n_f, n_s)
        xo_map = lambda n, s: (n, 0, s)
    const_map = lambda a, b: (0, 0)       # weights/biases stay VMEM-resident

    in_specs = [pl.BlockSpec((nbt, C, tile_hw), xo_map)]
    for arr in wb_flat:
        in_specs.append(pl.BlockSpec(arr.shape, const_map))
    out_spec = pl.BlockSpec((nbt, c_final, tile_hw), xo_map)

    # Never lower the scoped-VMEM limit below the 32 MiB default; raise it
    # (with headroom) when the chosen tiles need more, capped well under the
    # per-generation physical VMEM.
    vmem_limit = int(min(0.7 * vmem_cap,
                         max(32 * 1024 * 1024, 1.5 * est_bytes)))

    kernel = _make_fused_kernel(schedule, nbt, compute_dtype)

    y3 = pl.pallas_call(
        kernel,
        out_shape=jax.ShapeDtypeStruct((BT, c_final, HW), out_dtype),
        grid_spec=pltpu.PrefetchScalarGridSpec(
            num_scalar_prefetch=0,
            grid=grid,
            in_specs=in_specs,
            out_specs=out_spec,
        ),
        compiler_params=pltpu.CompilerParams(
            dimension_semantics=("parallel", "parallel"),
            vmem_limit_bytes=vmem_limit,
        ),
    )(x3, *wb_flat)

    return y3.reshape(B, T, c_final, H, W)


# --------------------------------------------------------------------------
# Deterministic parameter construction (mirrors MidMetaNet.__init__)
# --------------------------------------------------------------------------
def build_params(key, channel_in, channel_hid, N2):
    assert N2 >= 2
    # channel schedule: channel_in -> hid -> hid -> ... -> hid -> channel_in
    io = [(channel_in, channel_hid)]
    io += [(channel_hid, channel_hid)] * (N2 - 2)
    io.append((channel_hid, channel_in))

    def trunc_normal(k, shape, std=0.02):
        # trunc_normal_(w, std=0.02): truncated normal at +/- 2 std
        return std * jax.random.truncated_normal(k, -2.0, 2.0, shape, jnp.float32)

    layers = []
    keys = jax.random.split(key, len(io))
    for k, (in_c, out_c) in zip(keys, io):
        if in_c != out_c:
            # Conv3d(in_c, out_c, kernel_size=1): weight (out_c, in_c, 1, 1, 1)
            # stored here as (out_c, in_c) -- same orientation as PyTorch.
            w = trunc_normal(k, (out_c, in_c))
            b = jnp.zeros((out_c, 1), jnp.float32)
            layers.append((in_c, out_c, (w, b)))
        else:
            # in_c == out_c: no reduction; layer is the (identity-TODO) block.
            layers.append((in_c, out_c, None))
    return layers


# --------------------------------------------------------------------------
# Pure-JAX reference: per-layer f32 math (true module semantics with the
# identity-block placeholder); the kernel uses bf16 MXU inputs + f32 accum.
# --------------------------------------------------------------------------
def reference_forward(x, layers):
    B, T, C, H, W = x.shape
    z = x.reshape(B * T, C, H * W).astype(jnp.float32)
    c_final = C
    for (_, _, red) in layers:
        # TODO(synk): inner COTERE block treated as identity (see kernel).
        if red is None:
            continue
        w, b = red
        c_final = w.shape[0]
        z = jnp.einsum("oc,nci->noi", w.astype(jnp.float32), z,
                       preferred_element_type=jnp.float32)
        z = z + b.reshape(1, c_final, 1).astype(jnp.float32)
    return z.astype(x.dtype).reshape(B, T, c_final, H, W)


if __name__ == "__main__":
    key = jax.random.PRNGKey(0)
    kx, kp = jax.random.split(key)

    # Small shapes consistent with the module: x is (B, T, C, H, W)
    B, T, C, H, W = 2, 8, 4, 16, 16
    channel_in, channel_hid, N2 = C, 32, 2

    x = jax.random.normal(kx, (B, T, C, H, W), jnp.float32)
    layers = build_params(kp, channel_in, channel_hid, N2)

    y = mid_meta_net_forward(x, layers)
    y = jax.block_until_ready(y)

    y_ref = reference_forward(x, layers)
    assert y.shape == (B, T, C, H, W), y.shape
    assert jnp.allclose(y, y_ref, atol=1e-3, rtol=2e-2), float(
        jnp.max(jnp.abs(y.astype(jnp.float32) - y_ref.astype(jnp.float32))))

    print("KERNEL_OK")
</pallas_src>

<mosaic_0001>
module attributes {stable_mosaic.version = 11 : i64} {
  func.func @kernel(%arg0: i32, %arg1: i32, %arg2: memref<2x4x256xf32, #tpu.memory_space<vmem>>, %arg3: memref<4x4xbf16, #tpu.memory_space<vmem>>, %arg4: memref<4x1xf32, #tpu.memory_space<vmem>>, %arg5: memref<2x4x256xf32, #tpu.memory_space<vmem>>) attributes {dimension_semantics = [#tpu.dimension_semantics<parallel>, #tpu.dimension_semantics<parallel>], iteration_bounds = array<i64: 8, 1>, scalar_prefetch = 0 : i64, scratch_operands = 0 : i64, tpu.core_type = #tpu.core_type<tc>, window_params = [{transform_indices = @transform_0, window_bounds = array<i64: 2, 4, 256>}, {pipeline_mode = #tpu.pipeline_mode<synchronous>, transform_indices = @transform_1, window_bounds = array<i64: 4, 4>}, {pipeline_mode = #tpu.pipeline_mode<synchronous>, transform_indices = @transform_2, window_bounds = array<i64: 4, 1>}, {transform_indices = @transform_3, window_bounds = array<i64: 2, 4, 256>}]} {
    %c0 = arith.constant 0 : index
    %c0_0 = arith.constant 0 : index
    %0 = vector.load %arg3[%c0, %c0_0] : memref<4x4xbf16, #tpu.memory_space<vmem>>, vector<4x4xbf16>
    %c0_1 = arith.constant 0 : index
    %c0_2 = arith.constant 0 : index
    %1 = vector.load %arg4[%c0_1, %c0_2] : memref<4x1xf32, #tpu.memory_space<vmem>>, vector<4x1xf32>
    %2 = vector.shape_cast %1 : vector<4x1xf32> to vector<4x1xf32>
    %3 = vector.broadcast %2 : vector<4x1xf32> to vector<4x256xf32>
    %c0_3 = arith.constant 0 : index
    %c0_4 = arith.constant 0 : index
    %c0_5 = arith.constant 0 : index
    %4 = vector.load %arg2[%c0_3, %c0_4, %c0_5] : memref<2x4x256xf32, #tpu.memory_space<vmem>>, vector<1x4x256xf32>
    %5 = vector.shape_cast %4 : vector<1x4x256xf32> to vector<4x256xf32>
    %6 = arith.truncf %5 : vector<4x256xf32> to vector<4x256xbf16>
    %cst = arith.constant dense<0.000000e+00> : vector<4x256xf32>
    %7 = tpu.matmul %0, %6, %cst {dimension_numbers = #tpu.dot_dimension_numbers<[1], [0], [0], [1], [0, 0, 1, 1], [], []>} : vector<4x4xbf16>, vector<4x256xbf16>, vector<4x256xf32> -> vector<4x256xf32>
    %8 = arith.addf %7, %3 : vector<4x256xf32>
    %c0_6 = arith.constant 0 : index
    %c0_7 = arith.constant 0 : index
    %c0_8 = arith.constant 0 : index
    %9 = vector.load %arg5[%c0_6, %c0_7, %c0_8] : memref<2x4x256xf32, #tpu.memory_space<vmem>>, vector<1x4x256xf32>
    %10 = vector.shape_cast %9 : vector<1x4x256xf32> to vector<4x256xf32>
    %11 = vector.shape_cast %8 : vector<4x256xf32> to vector<1x4x256xf32>
    tpu.vector_store %arg5[%c0_6, %c0_7, %c0_8], %11 {strides = array<i32>} : memref<2x4x256xf32, #tpu.memory_space<vmem>>, vector<1x4x256xf32>,
    %c1 = arith.constant 1 : index
    %c0_9 = arith.constant 0 : index
    %c0_10 = arith.constant 0 : index
    %12 = vector.load %arg2[%c1, %c0_9, %c0_10] : memref<2x4x256xf32, #tpu.memory_space<vmem>>, vector<1x4x256xf32>
    %13 = vector.shape_cast %12 : vector<1x4x256xf32> to vector<4x256xf32>
    %14 = arith.truncf %13 : vector<4x256xf32> to vector<4x256xbf16>
    %cst_11 = arith.constant dense<0.000000e+00> : vector<4x256xf32>
    %15 = tpu.matmul %0, %14, %cst_11 {dimension_numbers = #tpu.dot_dimension_numbers<[1], [0], [0], [1], [0, 0, 1, 1], [], []>} : vector<4x4xbf16>, vector<4x256xbf16>, vector<4x256xf32> -> vector<4x256xf32>
    %16 = arith.addf %15, %3 : vector<4x256xf32>
    %c1_12 = arith.constant 1 : index
    %c0_13 = arith.constant 0 : index
    %c0_14 = arith.constant 0 : index
    %17 = vector.load %arg5[%c1_12, %c0_13, %c0_14] : memref<2x4x256xf32, #tpu.memory_space<vmem>>, vector<1x4x256xf32>
    %18 = vector.shape_cast %17 : vector<1x4x256xf32> to vector<4x256xf32>
    %19 = vector.shape_cast %16 : vector<4x256xf32> to vector<1x4x256xf32>
    tpu.vector_store %arg5[%c1_12, %c0_13, %c0_14], %19 {strides = array<i32>} : memref<2x4x256xf32, #tpu.memory_space<vmem>>, vector<1x4x256xf32>,
    return
  }
  func.func @transform_0(%arg0: i32, %arg1: i32) -> (i32, i32, i32) {
    %c0_i32 = arith.constant 0 : i32
    %c0_i32_0 = arith.constant 0 : i32
    return %arg0, %c0_i32, %arg1 : i32, i32, i32
  }
  func.func @transform_1(%arg0: i32, %arg1: i32) -> (i32, i32) {
    %c0_i32 = arith.constant 0 : i32
    %c0_i32_0 = arith.constant 0 : i32
    %c0_i32_1 = arith.constant 0 : i32
    return %c0_i32, %c0_i32_0 : i32, i32
  }
  func.func @transform_2(%arg0: i32, %arg1: i32) -> (i32, i32) {
    %c0_i32 = arith.constant 0 : i32
    %c0_i32_0 = arith.constant 0 : i32
    %c0_i32_1 = arith.constant 0 : i32
    return %c0_i32, %c0_i32_0 : i32, i32
  }
  func.func @transform_3(%arg0: i32, %arg1: i32) -> (i32, i32, i32) {
    %c0_i32 = arith.constant 0 : i32
    %c0_i32_0 = arith.constant 0 : i32
    return %arg0, %c0_i32, %arg1 : i32, i32, i32
  }
}

</mosaic_0001>

<llo_original>
// kernel: tpu_custom_call.1
$region0: #{tpu_custom_call.1}
  #allocation0 [shape = 'u32[]', space=smem, size = 0x4, offset = 0x4, fixed_abs, tag = 'smem constant byte address 0x4 - core index']
  #allocation1 [shape = 'u32[144,128]{1,0:T(1,128)}', space=vmem, size = 0x12000, scoped, tag = 'internal scratch']
  %s0 = inlined_call_operand.hbm [shape: f32[16,4,256], index: 0, kind: input, shape index: {}]
  %s1 = inlined_call_operand.vmem [shape: bf16[4,4], index: 1, kind: input, shape index: {}]
  %s2 = inlined_call_operand.vmem [shape: f32[4,1], index: 2, kind: input, shape index: {}]
  %s3 = inlined_call_operand.hbm [shape: f32[16,4,256], index: 3, kind: output, shape index: {}]
  %s4 = sld [smem:[#allocation0]]
  $region49: #{tpu_custom_call.1} parent=0
    _
  %s6 = ssub.s32 1, %s4
  %s7 = scalar_select 0, %s6, %s4
  $region1: #{tpu_custom_call.1} parent=0
    #allocation2 [shape = 'u8[16384]{0}', space=vmem, size = 0x4000, scoped, tag = 'input window, operand 0']
    #allocation3 [shape = 's32[2]{0}', space=sflag, size = 0x8, scoped, tag = 'scoped memory for tpu_custom_call.1']
    #allocation4 [shape = 's32[2]{0}', space=sflag, size = 0x8, scoped, tag = 'scoped memory for tpu_custom_call.1']
    #allocation5 [shape = 'u8[16384]{0}', space=vmem, size = 0x4000, scoped, tag = 'output window, operand 0']
    %8 = vsyncpa [#allocation3], 0
    %s9 = scalar_lea.sflag [#allocation3], 1
    %10 = vsyncpa %s9, 0
    %11 = vsyncpa [#allocation4], 0
    %s12 = scalar_lea.sflag [#allocation4], 1
    %13 = vsyncpa %s12, 0
    loop: start=0, step=1, limit=10
    $region2: #{tpu_custom_call.1} parent=1 // loop_pre_header
      _
    $region3: #{tpu_custom_call.1} parent=1 // loop_header
      %s15 = sphi 0, %s19
      %p16 = scmp.ge.s32.totalorder %s15, 10
      %s22 = sphi 0, %s34
      %s23 = sphi 0, %s30
      %s24 = sphi 0, %s22
      %s25 = sphi 0, %s23
      %s26 = sphi 0, %s24
      %s27 = sphi 0, %s25
      %s39 = sphi 0, %s41
      %s42 = sphi 0, %s39
      %s43 = sphi 0, %s42
      %s59 = sphi 0, %s43
      %s63 = sphi 0, %s63
      %s65 = sphi 0, %s63
      %s66 = sphi 0, %s65
      %s80 = sphi 0, %s66
      %s84 = sphi 0, %s84
      %s86 = sphi 0, %s84
      %s87 = sphi 0, %s86
      %s101 = sphi 0, %s87
      %s109 = sphi 0, %s111
      %s112 = sphi 0, %s109
      %s113 = sphi 0, %s112
      %s129 = sphi 0, %s113
    $region4: #{tpu_custom_call.1} parent=1 // loop_header_branch
      %18 = sbr.rel (%p16) target = $region8
    $region5: #{tpu_custom_call.1} parent=1 // loop_body
      %s20 = ssub.s32 %s15, 1
      %s21 = ssub.s32 %s15, 2
      %s28 = sadd.s32 1, %s23
      %p29 = scmp.ge.s32.totalorder %s28, 1
      %s30 = scalar_select %p29, 0, %s28
      %s31 = sadd.s32 1, %s22
      %s32 = scalar_select %p29, %s31, %s22
      %p33 = scmp.ge.s32.totalorder %s32, 8
      %s34 = scalar_select %p33, 0, %s32
      %s35 = ssub.s32 %s22, %s34
      %s36 = ssub.s32 %s23, %s30
      %s37 = sor.u32 %s35, %s36
      %p38 = scmp.eq.s32.totalorder %s37, 0
      %s40 = sadd.s32 %s39, 1
      %s41 = scalar_select %p38, %s39, %s40
      %p44 = pneg %p38
      %p45 = scmp.eq.s32.totalorder %s15, 7
      %p46 = por %p44, %p45
      %p47 = scmp.ne.s32.totalorder %s39, %s42
      %p48 = scmp.eq.s32.totalorder %s15, 0
      %p49 = por %p47, %p48
      %p50 = scmp.ne.s32.totalorder %s39, %s42
      %p51 = scmp.eq.s32.totalorder %s20, 7
      %p52 = por %p50, %p51
      %p53 = scmp.ne.s32.totalorder %s42, %s43
      %p54 = scmp.eq.s32.totalorder %s20, 0
      %p55 = por %p53, %p54
      %p56 = scmp.ne.s32.totalorder %s42, %s43
      %p57 = scmp.eq.s32.totalorder %s21, 7
      %p58 = por %p56, %p57
      %p60 = scmp.ne.s32.totalorder %s43, %s59
      %p61 = scmp.eq.s32.totalorder %s21, 0
      %p62 = por %p60, %p61
      %s64 = sadd.s32 %s63, 1
      %p67 = scmp.eq.s32.totalorder %s15, 7
      %p68 = scmp.ne.s32.totalorder %s63, %s65
      %p69 = scmp.eq.s32.totalorder %s15, 0
      %p70 = por %p68, %p69
      %p71 = scmp.ne.s32.totalorder %s63, %s65
      %p72 = scmp.eq.s32.totalorder %s20, 7
      %p73 = por %p71, %p72
      %p74 = scmp.ne.s32.totalorder %s65, %s66
      %p75 = scmp.eq.s32.totalorder %s20, 0
      %p76 = por %p74, %p75
      %p77 = scmp.ne.s32.totalorder %s65, %s66
      %p78 = scmp.eq.s32.totalorder %s21, 7
      %p79 = por %p77, %p78
      %p81 = scmp.ne.s32.totalorder %s66, %s80
      %p82 = scmp.eq.s32.totalorder %s21, 0
      %p83 = por %p81, %p82
      %s85 = sadd.s32 %s84, 1
      %p88 = scmp.eq.s32.totalorder %s15, 7
      %p89 = scmp.ne.s32.totalorder %s84, %s86
      %p90 = scmp.eq.s32.totalorder %s15, 0
      %p91 = por %p89, %p90
      %p92 = scmp.ne.s32.totalorder %s84, %s86
      %p93 = scmp.eq.s32.totalorder %s20, 7
      %p94 = por %p92, %p93
      %p95 = scmp.ne.s32.totalorder %s86, %s87
      %p96 = scmp.eq.s32.totalorder %s20, 0
      %p97 = por %p95, %p96
      %p98 = scmp.ne.s32.totalorder %s86, %s87
      %p99 = scmp.eq.s32.totalorder %s21, 7
      %p100 = por %p98, %p99
      %p102 = scmp.ne.s32.totalorder %s87, %s101
      %p103 = scmp.eq.s32.totalorder %s21, 0
      %p104 = por %p102, %p103
      %s105 = ssub.s32 %s22, %s34
      %s106 = ssub.s32 %s23, %s30
      %s107 = sor.u32 %s105, %s106
      %p108 = scmp.eq.s32.totalorder %s107, 0
      %s110 = sadd.s32 %s109, 1
      %s111 = scalar_select %p108, %s109, %s110
      %p114 = pneg %p108
      %p115 = scmp.eq.s32.totalorder %s15, 7
      %p116 = por %p114, %p115
      %p117 = scmp.ne.s32.totalorder %s109, %s112
      %p118 = scmp.eq.s32.totalorder %s15, 0
      %p119 = por %p117, %p118
      %p120 = scmp.ne.s32.totalorder %s109, %s112
      %p121 = scmp.eq.s32.totalorder %s20, 7
      %p122 = por %p120, %p121
      %p123 = scmp.ne.s32.totalorder %s112, %s113
      %p124 = scmp.eq.s32.totalorder %s20, 0
      %p125 = por %p123, %p124
      %p126 = scmp.ne.s32.totalorder %s112, %s113
      %p127 = scmp.eq.s32.totalorder %s21, 7
      %p128 = por %p126, %p127
      %p130 = scmp.ne.s32.totalorder %s113, %s129
      %p131 = scmp.eq.s32.totalorder %s21, 0
      %p132 = por %p130, %p131
      %p133 = scmp.le.s32.totalorder 1, %s15
      %p134 = scmp.lt.s32.totalorder %s15, 9
      %p135 = pnand %p133, %p134
      %p136 = pneg %p135
      // Predicated region
      $region9: #{tpu_custom_call.1} parent=5 // pred_check
        _
      $region10: #{tpu_custom_call.1} parent=5 // pred_check_branch
        %138 = sbr.rel (%p135) target = $region12
      $region11: #{tpu_custom_call.1} parent=5 // pred_region
        %s139 = ssub.s32 %s15, 1
        // Predicated region
        $region13: #{tpu_custom_call.1} parent=11 // pred_check
          %p140 = pneg %p76
        $region14: #{tpu_custom_call.1} parent=11 // pred_check_branch
          %142 = sbr.rel (%p140) target = $region16
        $region15: #{tpu_custom_call.1} parent=11 // pred_region
          _
        $region16: #{tpu_custom_call.1} parent=11 // pred_fallthru
          _
        // Predicated region
        $region17: #{tpu_custom_call.1} parent=11 // pred_check
          %p143 = pneg %p97
        $region18: #{tpu_custom_call.1} parent=11 // pred_check_branch
          %145 = sbr.rel (%p143) target = $region20
        $region19: #{tpu_custom_call.1} parent=11 // pred_region
          _
        $region20: #{tpu_custom_call.1} parent=11 // pred_fallthru
          _
      $region12: #{tpu_custom_call.1} parent=5 // pred_fallthru
        _
      %p146 = scmp.lt.s32.totalorder %s15, 8
      // Predicated region
      $region21: #{tpu_custom_call.1} parent=5 // pred_check
        %p147 = pneg %p146
      $region22: #{tpu_custom_call.1} parent=5 // pred_check_branch
        %149 = sbr.rel (%p147) target = $region24
      $region23: #{tpu_custom_call.1} parent=5 // pred_region
        // Predicated region
        $region25: #{tpu_custom_call.1} parent=23 // pred_check
          %p150 = pneg %p49
        $region26: #{tpu_custom_call.1} parent=23 // pred_check_branch
          %152 = sbr.rel (%p150) target = $region28
        $region27: #{tpu_custom_call.1} parent=23 // pred_region
          %s153 = sand.u32 %s39, 1
          %s154 = scalar_lea.sflag [#allocation3], %s153
          %s155 = sand.u32 %s39, 1
          %s156 = smul.addr %s155, 16
          %s157 = scalar_lea.vmem [#allocation2], %s156
          %s158 = smul.u32 2, %s22
          %s159 = smul.u32 2, %s23
          %s161 = ssub.s32 256, 256
          %162 = vsyncadd %s154, %s161
          %s163 = smul.addr %s158, 2
          %s164 = sadd.s32 %s159, %s163
          %s165 = smul.addr %s164, 64
          %s166 = scalar_lea.hbm %s0, %s165
          %s167 = sshll.u32 %s157, 4
          %s168 = int_to_ptr.vmem [resolvable:$true] %s167
          %173 = dma.hbm_to_vmem [thread:$0]  %s166, 256, %s168, %s154, 128, 128, 8
        $region28: #{tpu_custom_call.1} parent=23 // pred_fallthru
          _
      $region24: #{tpu_custom_call.1} parent=5 // pred_fallthru
        _
      %p174 = scmp.le.s32.totalorder 1, %s15
      %p175 = scmp.lt.s32.totalorder %s15, 9
      %p176 = pnand %p174, %p175
      %p177 = pneg %p176
      // Predicated region
      $region29: #{tpu_custom_call.1} parent=5 // pred_check
        _
      $region30: #{tpu_custom_call.1} parent=5 // pred_check_branch
        %179 = sbr.rel (%p176) target = $region32
      $region31: #{tpu_custom_call.1} parent=5 // pred_region
        %s180 = ssub.s32 %s15, 1
        %s181 = sand.u32 %s42, 1
        %s182 = scalar_lea.sflag [#allocation3], %s181
        %s183 = sand.u32 %s42, 1
        %s184 = smul.addr %s183, 16
        %s185 = scalar_lea.vmem [#allocation2], %s184
        // Predicated region
        $region33: #{tpu_custom_call.1} parent=31 // pred_check
          %p186 = pneg %p55
        $region34: #{tpu_custom_call.1} parent=31 // pred_check_branch
          %188 = sbr.rel (%p186) target = $region36
        $region35: #{tpu_custom_call.1} parent=31 // pred_region
          %189 = dma.done %s182, 256
        $region36: #{tpu_custom_call.1} parent=31 // pred_fallthru
          _
        %s190 = sand.u32 %s42, 1
        %s191 = scalar_lea.sflag [#allocation3], %s190
        %s192 = sand.u32 %s42, 1
        %s193 = smul.addr %s192, 16
        %s194 = scalar_lea.vmem [#allocation2], %s193
        %p195 = pneg %p55
        %p196 = pneg %p52
        %p197 = pneg %p76
        %p198 = pneg %p73
        %p199 = pneg %p97
        %p200 = pneg %p94
        %p201 = pneg %p125
        %p202 = pneg %p122
        %s203 = sand.u32 %s112, 1
        %s204 = scalar_lea.sflag [#allocation4], %s203
        %s205 = sand.u32 %s112, 1
        %s206 = smul.addr %s205, 16
        %s207 = scalar_lea.vmem [#allocation5], %s206
        %s208 = smul.u32 2, %s24
        %s209 = smul.u32 2, %s25
        %s210 = smul.u32 2, %s24
        %s211 = smul.u32 2, %s25
        %v213 = vld [vmem:[%s1] sm:$0x3]
        %v214 = vld [vmem:[%s2] sm:$0xf]
        %216 = vset.pattern.permute.xlu0 0
        %217 = vperm.xlu0 %216, %v214
        %v218 = vpop.permute.xlu0 %217
        %v220 = vld [vmem:[%s185] sm:$0xff]
        %v222 = vcombine.high %v220, %v220
        %v224 = vpack.c.bf16 %v220, %v220
        %v225 = vpack.c.bf16 %v222, %v222
        %vm226 = vcmask 31744
        %v228 = vsel %vm226, %v213, 0
        %vm230 = vcmask 1041408
        %v232 = vsel %vm230, %v224, 0
        %v235 = vsel %vm230, %v225, 0
        %237 = vmatprep.subr.bf16.mxu0 %v235
        %238 = vmatpush1.bf16.msra.mxu0 %v232
        %239 = vmatprep.subr.bf16.mxu0 0
        %240 = vmatpush1.bf16.msra.mxu0 0
        %241 = vmatprep.subr.bf16.mxu0 0
        %242 = vmatpush1.bf16.msra.mxu0 0
        %243 = vmatprep.subr.bf16.mxu0 0
        %244 = vmatpush1.bf16.msra.mxu0 0
        %245 = vmatprep.subr.bf16.mxu0 0
        %246 = vmatpush1.bf16.msra.mxu0 0
        %247 = vmatprep.subr.bf16.mxu0 0
        %248 = vmatpush1.bf16.msra.mxu0 0
        %249 = vmatprep.subr.bf16.mxu0 0
        %250 = vmatpush1.bf16.msra.mxu0 0
        %251 = vmatprep.subr.bf16.mxu0 0
        %252 = vmatpush1.bf16.msra.mxu0 0
        %253 = vmatprep.subr.bf16.mxu0 0
        %254 = vmatpush1.bf16.msra.mxu0 0
        %255 = vmatprep.subr.bf16.mxu0 0
        %256 = vmatpush1.bf16.msra.mxu0 0
        %257 = vmatprep.subr.bf16.mxu0 0
        %258 = vmatpush1.bf16.msra.mxu0 0
        %259 = vmatprep.subr.bf16.mxu0 0
        %260 = vmatpush1.bf16.msra.mxu0 0
        %261 = vmatprep.subr.bf16.mxu0 0
        %262 = vmatpush1.bf16.msra.mxu0 0
        %263 = vmatprep.subr.bf16.mxu0 0
        %264 = vmatpush1.bf16.msra.mxu0 0
        %265 = vmatprep.subr.bf16.mxu0 0
        %266 = vmatpush1.bf16.msra.mxu0 0
        %267 = vmatprep.subr.bf16.mxu0 0
        %268 = vmatpush1.bf16.msra.mxu0 0
        %269 = vmatprep.mubr.bf16.mxu0 0
        %270 = vmatmul.mubr.bf16.gmra.mrb[0].mxu0 %v228
        %v271 = vpop.f32.mrb[0].mxu0
        %v272 = vadd.f32 %v218, %v271
        %v273 = vpop.f32.mrb[0].mxu0
        %v274 = vadd.f32 %v218, %v273
        %v275 = vpop.f32.mrb[0].mxu0
        %v276 = vpop.f32.mrb[0].mxu0
        %277 = vdwg.mxu0
        %v280 = vcombine.low %v272, %v274
        %282 = vst [vmem:[%s207] sm:$0xff] %v280
        %s283 = scalar_lea.vmem %s185, 8 [#allocation2]
        %v284 = vld [vmem:[%s283] sm:$0xff]
        %v286 = vcombine.high %v284, %v284
        %v288 = vpack.c.bf16 %v284, %v284
        %v289 = vpack.c.bf16 %v286, %v286
        %v291 = vsel %vm230, %v288, 0
        %v294 = vsel %vm230, %v289, 0
        %296 = vmatprep.subr.bf16.mxu0 %v294
        %297 = vmatpush1.bf16.msra.mxu0 %v291
        %298 = vmatprep.subr.bf16.mxu0 0
        %299 = vmatpush1.bf16.msra.mxu0 0
        %300 = vmatprep.subr.bf16.mxu0 0
        %301 = vmatpush1.bf16.msra.mxu0 0
        %302 = vmatprep.subr.bf16.mxu0 0
        %303 = vmatpush1.bf16.msra.mxu0 0
        %304 = vmatprep.subr.bf16.mxu0 0
        %305 = vmatpush1.bf16.msra.mxu0 0
        %306 = vmatprep.subr.bf16.mxu0 0
        %307 = vmatpush1.bf16.msra.mxu0 0
        %308 = vmatprep.subr.bf16.mxu0 0
        %309 = vmatpush1.bf16.msra.mxu0 0
        %310 = vmatprep.subr.bf16.mxu0 0
        %311 = vmatpush1.bf16.msra.mxu0 0
        %312 = vmatprep.subr.bf16.mxu0 0
        %313 = vmatpush1.bf16.msra.mxu0 0
        %314 = vmatprep.subr.bf16.mxu0 0
        %315 = vmatpush1.bf16.msra.mxu0 0
        %316 = vmatprep.subr.bf16.mxu0 0
        %317 = vmatpush1.bf16.msra.mxu0 0
        %318 = vmatprep.subr.bf16.mxu0 0
        %319 = vmatpush1.bf16.msra.mxu0 0
        %320 = vmatprep.subr.bf16.mxu0 0
        %321 = vmatpush1.bf16.msra.mxu0 0
        %322 = vmatprep.subr.bf16.mxu0 0
        %323 = vmatpush1.bf16.msra.mxu0 0
        %324 = vmatprep.subr.bf16.mxu0 0
        %325 = vmatpush1.bf16.msra.mxu0 0
        %326 = vmatprep.subr.bf16.mxu0 0
        %327 = vmatpush1.bf16.msra.mxu0 0
        %328 = vmatprep.mubr.bf16.mxu0 0
        %329 = vmatmul.mubr.bf16.gmra.mrb[0].mxu0 %v228
        %v330 = vpop.f32.mrb[0].mxu0
        %v331 = vadd.f32 %v218, %v330
        %v332 = vpop.f32.mrb[0].mxu0
        %v333 = vadd.f32 %v218, %v332
        %v334 = vpop.f32.mrb[0].mxu0
        %v335 = vpop.f32.mrb[0].mxu0
        %336 = vdwg.mxu0
        %v339 = vcombine.low %v331, %v333
        %s341 = scalar_lea.vmem %s207, 8 [#allocation5]
        %342 = vst [vmem:[%s341] sm:$0xff] %v339
        %s343 = sand.u32 %s112, 1
        %s344 = scalar_lea.sflag [#allocation4], %s343
        %s345 = sand.u32 %s112, 1
        %s346 = smul.addr %s345, 16
        %s347 = scalar_lea.vmem [#allocation5], %s346
        // Predicated region
        $region37: #{tpu_custom_call.1} parent=31 // pred_check
          %p348 = pneg %p122
        $region38: #{tpu_custom_call.1} parent=31 // pred_check_branch
          %350 = sbr.rel (%p348) target = $region40
        $region39: #{tpu_custom_call.1} parent=31 // pred_region
          %s351 = smul.u32 2, %s24
          %s352 = smul.u32 2, %s25
          %s354 = ssub.s32 256, 256
          %355 = vsyncadd %s344, %s354
          %s356 = smul.addr %s351, 2
          %s357 = sadd.s32 %s352, %s356
          %s358 = smul.addr %s357, 64
          %s359 = scalar_lea.hbm %s3, %s358
          %s360 = sshll.u32 %s347, 4
          %s361 = int_to_ptr.vmem [resolvable:$true] %s360
          %366 = dma.vmem_to_hbm [thread:$0]  %s361, 256, %s359, %s344, 128, 128, 8
        $region40: #{tpu_custom_call.1} parent=31 // pred_fallthru
          _
      $region32: #{tpu_custom_call.1} parent=5 // pred_fallthru
        _
      %p367 = scmp.le.s32.totalorder 2, %s15
      // Predicated region
      $region41: #{tpu_custom_call.1} parent=5 // pred_check
        %p368 = pneg %p367
      $region42: #{tpu_custom_call.1} parent=5 // pred_check_branch
        %370 = sbr.rel (%p368) target = $region44
      $region43: #{tpu_custom_call.1} parent=5 // pred_region
        %s371 = ssub.s32 %s15, 2
        // Predicated region
        $region45: #{tpu_custom_call.1} parent=43 // pred_check
          %p372 = pneg %p128
        $region46: #{tpu_custom_call.1} parent=43 // pred_check_branch
          %374 = sbr.rel (%p372) target = $region48
        $region47: #{tpu_custom_call.1} parent=43 // pred_region
          %s375 = sand.u32 %s113, 1
          %s376 = scalar_lea.sflag [#allocation4], %s375
          %s377 = sand.u32 %s113, 1
          %s378 = smul.addr %s377, 16
          %s379 = scalar_lea.vmem [#allocation5], %s378
          %380 = dma.done %s376, 256
        $region48: #{tpu_custom_call.1} parent=43 // pred_fallthru
          _
      $region44: #{tpu_custom_call.1} parent=5 // pred_fallthru
        _
    $region6: #{tpu_custom_call.1} parent=1 // loop_footer
      %s19 = sadd.s32 1, %s15
    $region7: #{tpu_custom_call.1} parent=1 // loop_footer_branch
      %14 = sbr.rel target = $region3
    $region8: #{tpu_custom_call.1} parent=1 // loop_exit
      _
    %381 = vsyncpa [#allocation3], 1
    %s382 = scalar_lea.sflag [#allocation3], 1
    %383 = vsyncpa %s382, 1
    %384 = vsyncpa [#allocation4], 1
    %s385 = scalar_lea.sflag [#allocation4], 1
    %386 = vsyncpa %s385, 1

</llo_original>
